<compile_context>
chip_gen: v5e
topology: v5e:2x2
jax: 0.10.0
libtpu: 0.0.40
codegen_flags: <defaults>
</compile_context>

<pallas_src>
import jax
import jax.numpy as jnp
from jax.experimental import pallas as pl
from jax.experimental.pallas import tpu as pltpu


# ------------------------- 1x1 (pointwise) conv -------------------------

def _pointwise_kernel(x_ref, w_ref, b_ref, o_ref):
    # x: (Cin, TN), w: (Cout, Cin), b: (Cout, 1) -> o: (Cout, TN)
    x = x_ref[...].astype(jnp.bfloat16)
    w = w_ref[...].astype(jnp.bfloat16)
    acc = jnp.dot(w, x, preferred_element_type=jnp.float32)
    o_ref[...] = (acc + b_ref[...]).astype(o_ref.dtype)


def _pick_tile(n):
    for t in (2048, 1024, 512, 256, 128):
        if n % t == 0:
            return t
    return n


def pointwise_conv(x, w, b):
    """1x1 conv in (B, C, N) layout. w: (Cout, Cin, 1, 1), b: (Cout,)."""
    B, Cin, N = x.shape
    Cout = w.shape[0]
    w2 = w.reshape(Cout, Cin).astype(jnp.float32)
    b2 = b.reshape(Cout, 1).astype(jnp.float32)
    TN = _pick_tile(N)
    grid = (B, N // TN)
    return pl.pallas_call(
        _pointwise_kernel,
        out_shape=jax.ShapeDtypeStruct((B, Cout, N), x.dtype),
        grid=grid,
        in_specs=[pl.BlockSpec((None, Cin, TN), lambda i, j: (i, 0, j)),
                  pl.BlockSpec((Cout, Cin), lambda i, j: (0, 0)),
                  pl.BlockSpec((Cout, 1), lambda i, j: (0, 0))],
        out_specs=pl.BlockSpec((None, Cout, TN), lambda i, j: (i, 0, j)),
        compiler_params=pltpu.CompilerParams(
            dimension_semantics=("parallel", "parallel"),
            vmem_limit_bytes=32 * 1024 * 1024),
    )(x, w2, b2)


# ------------------------- depthwise 3x3 conv -------------------------

def _make_tap_masks(H, W):
    """(9, H*W) float mask: 1 where the (dy, dx) tap stays inside the image."""
    rows = jnp.arange(H).reshape(H, 1)
    cols = jnp.arange(W).reshape(1, W)
    ms = []
    for dy in (-1, 0, 1):
        for dx in (-1, 0, 1):
            m = ((rows + dy >= 0) & (rows + dy < H) &
                 (cols + dx >= 0) & (cols + dx < W))
            ms.append(m.reshape(H * W))
    return jnp.stack(ms, axis=0).astype(jnp.float32)


def depthwise_conv3x3_flat(x, w, b, H, W):
    """Depthwise 3x3 conv, padding=1, on flattened (B, C, N=H*W) tensors.

    x: (B, C, N); w: (C, 3, 3); b: (C,)."""
    B, C, N = x.shape
    w9 = w.reshape(C, 9).astype(jnp.float32)
    b2 = b.reshape(C, 1).astype(jnp.float32)
    mask = _make_tap_masks(H, W)
    shifts = tuple(dy * W + dx for dy in (-1, 0, 1) for dx in (-1, 0, 1))

    def kernel(x_ref, w_ref, b_ref, m_ref, o_ref):
        Cc, Nn = o_ref.shape
        xv = x_ref[...].astype(jnp.float32)
        wv = w_ref[...]
        mv = m_ref[...]
        acc = jnp.zeros((Cc, Nn), jnp.float32) + b_ref[...]
        for t, s in enumerate(shifts):
            if s == 0:
                sh = xv
            elif s > 0:
                sh = jnp.concatenate(
                    [xv[:, s:], jnp.zeros((Cc, s), jnp.float32)], axis=1)
            else:
                sh = jnp.concatenate(
                    [jnp.zeros((Cc, -s), jnp.float32), xv[:, :Nn + s]], axis=1)
            acc = acc + wv[:, t:t + 1] * (sh * mv[t:t + 1, :])
        o_ref[...] = acc.astype(o_ref.dtype)

    # TODO(synk): tile N (with a 1-row halo) for very large spatial sizes.
    return pl.pallas_call(
        kernel,
        out_shape=jax.ShapeDtypeStruct((B, C, N), x.dtype),
        grid=(B,),
        in_specs=[pl.BlockSpec((None, C, N), lambda i: (i, 0, 0)),
                  pl.BlockSpec((C, 9), lambda i: (0, 0)),
                  pl.BlockSpec((C, 1), lambda i: (0, 0)),
                  pl.BlockSpec((9, N), lambda i: (0, 0))],
        out_specs=pl.BlockSpec((None, C, N), lambda i: (i, 0, 0)),
        compiler_params=pltpu.CompilerParams(
            dimension_semantics=("parallel",),
            vmem_limit_bytes=32 * 1024 * 1024),
    )(x, w9, b2, mask)


# ------------------------- channel-attention core -------------------------

def _attn_kernel(t_ref, qkv_ref, o_ref):
    # qkv: (3, heads, c_head, N); temp: (heads, 1, 1)
    q = qkv_ref[0].astype(jnp.float32)
    k = qkv_ref[1].astype(jnp.float32)
    v = qkv_ref[2]
    # L2 normalize over the spatial axis (matches F.normalize, eps=1e-12).
    qn = q * jax.lax.rsqrt(jnp.maximum(jnp.sum(q * q, axis=-1, keepdims=True),
                                       1e-24))
    kn = k * jax.lax.rsqrt(jnp.maximum(jnp.sum(k * k, axis=-1, keepdims=True),
                                       1e-24))
    s = jnp.einsum('hcn,hdn->hcd',
                   qn.astype(jnp.bfloat16), kn.astype(jnp.bfloat16),
                   preferred_element_type=jnp.float32)
    s = s * t_ref[...]
    s = s - jnp.max(s, axis=-1, keepdims=True)
    e = jnp.exp(s)
    p = e * pl.reciprocal(jnp.sum(e, axis=-1, keepdims=True), approx=True)
    out = jnp.einsum('hcd,hdn->hcn',
                     p.astype(jnp.bfloat16), v.astype(jnp.bfloat16),
                     preferred_element_type=jnp.float32)
    o_ref[...] = out.astype(o_ref.dtype)


def attention_core(qkv, temp):
    """qkv: (B, 3, heads, c_head, N); temp: (heads, 1, 1) -> (B, heads, c_head, N)."""
    B, _, Hh, Ch, N = qkv.shape
    return pl.pallas_call(
        _attn_kernel,
        out_shape=jax.ShapeDtypeStruct((B, Hh, Ch, N), qkv.dtype),
        grid=(B,),
        in_specs=[pl.BlockSpec((Hh, 1, 1), lambda i: (0, 0, 0)),
                  pl.BlockSpec((None, 3, Hh, Ch, N), lambda i: (i, 0, 0, 0, 0))],
        out_specs=pl.BlockSpec((None, Hh, Ch, N), lambda i: (i, 0, 0, 0)),
        compiler_params=pltpu.CompilerParams(
            dimension_semantics=("parallel",)),
    )(temp.astype(jnp.float32), qkv)


# ------------------------- module forward -------------------------

def _merged_cross_kernel(wx, wy):
    """identity + conv(3,1) + conv(1,3) merged into one depthwise 3x3 kernel."""
    C = wx.shape[0]
    ke = jnp.zeros((C, 3, 3), jnp.float32)
    ke = ke.at[:, :, 1].add(wx[:, 0, :, 0].astype(jnp.float32))
    ke = ke.at[:, 1, :].add(wy[:, 0, 0, :].astype(jnp.float32))
    ke = ke.at[:, 1, 1].add(1.0)
    return ke


def attention_forward(x, params, num_heads):
    B, C, H, W = x.shape
    N = H * W
    xf = x.reshape(B, C, N)                                        # free reshape

    t = pointwise_conv(xf, params['w_qkv'], params['b_qkv'])       # (B, 3C, N)
    qkv = depthwise_conv3x3_flat(t, params['w_dw'].reshape(3 * C, 3, 3),
                                 params['b_dw'], H, W)             # qkv_dwconv

    # q + conv(3,1)(q) + conv(1,3)(q) (and same for k, v) as ONE fused
    # depthwise 3x3 pass over all 3C channels.
    ke = jnp.concatenate([_merged_cross_kernel(params['wxq'], params['wyq']),
                          _merged_cross_kernel(params['wxk'], params['wyk']),
                          _merged_cross_kernel(params['wxv'], params['wyv'])],
                         axis=0)                                   # (3C, 3, 3)
    qkv = depthwise_conv3x3_flat(qkv, ke, jnp.zeros((3 * C,), jnp.float32),
                                 H, W)

    c_head = C // num_heads
    qkv5 = qkv.reshape(B, 3, num_heads, c_head, N)                 # free reshape
    out = attention_core(qkv5, params['temperature'].reshape(num_heads, 1, 1))
    out = out.reshape(B, C, N)                                     # free reshape

    y = pointwise_conv(out, params['w_proj'], params['b_proj'])
    return y.reshape(B, C, H, W)


# ------------------------- pure-JAX reference -------------------------

def _conv2d_ref(x, w, b, padding, groups):
    out = jax.lax.conv_general_dilated(
        x, w, window_strides=(1, 1), padding=padding,
        dimension_numbers=('NCHW', 'OIHW', 'NCHW'),
        feature_group_count=groups)
    if b is not None:
        out = out + b[None, :, None, None]
    return out


def reference_forward(x, params, num_heads):
    B, C, H, W = x.shape
    t = _conv2d_ref(x, params['w_qkv'], params['b_qkv'], [(0, 0), (0, 0)], 1)
    qkv = _conv2d_ref(t, params['w_dw'], params['b_dw'], [(1, 1), (1, 1)], 3 * C)
    q, k, v = jnp.split(qkv, 3, axis=1)
    q = q + _conv2d_ref(q, params['wxq'], None, [(1, 1), (0, 0)], C) \
          + _conv2d_ref(q, params['wyq'], None, [(0, 0), (1, 1)], C)
    k = k + _conv2d_ref(k, params['wxk'], None, [(1, 1), (0, 0)], C) \
          + _conv2d_ref(k, params['wyk'], None, [(0, 0), (1, 1)], C)
    v = v + _conv2d_ref(v, params['wxv'], None, [(1, 1), (0, 0)], C) \
          + _conv2d_ref(v, params['wyv'], None, [(0, 0), (1, 1)], C)
    c_head = C // num_heads
    qh = q.reshape(B, num_heads, c_head, H * W)
    kh = k.reshape(B, num_heads, c_head, H * W)
    vh = v.reshape(B, num_heads, c_head, H * W)
    qn = qh / jnp.maximum(jnp.linalg.norm(qh, axis=-1, keepdims=True), 1e-12)
    kn = kh / jnp.maximum(jnp.linalg.norm(kh, axis=-1, keepdims=True), 1e-12)
    attn = jnp.einsum('bhcn,bhdn->bhcd', qn, kn) * params['temperature'][None]
    attn = jax.nn.softmax(attn, axis=-1)
    out = jnp.einsum('bhcd,bhdn->bhcn', attn, vh)
    out = out.reshape(B, C, H, W)
    return _conv2d_ref(out, params['w_proj'], params['b_proj'], [(0, 0), (0, 0)], 1)


# ------------------------- deterministic params -------------------------

def init_params(key, dim, num_heads):
    ks = jax.random.split(key, 12)
    s = 0.1
    return {
        'temperature': 1.0 + 0.25 * jnp.arange(num_heads, dtype=jnp.float32
                                               ).reshape(num_heads, 1, 1),
        'wxq': s * jax.random.normal(ks[0], (dim, 1, 3, 1), jnp.float32),
        'wyq': s * jax.random.normal(ks[1], (dim, 1, 1, 3), jnp.float32),
        'wxk': s * jax.random.normal(ks[2], (dim, 1, 3, 1), jnp.float32),
        'wyk': s * jax.random.normal(ks[3], (dim, 1, 1, 3), jnp.float32),
        'wxv': s * jax.random.normal(ks[4], (dim, 1, 3, 1), jnp.float32),
        'wyv': s * jax.random.normal(ks[5], (dim, 1, 1, 3), jnp.float32),
        'w_qkv': s * jax.random.normal(ks[6], (dim * 3, dim, 1, 1), jnp.float32),
        'b_qkv': s * jax.random.normal(ks[7], (dim * 3,), jnp.float32),
        'w_dw': s * jax.random.normal(ks[8], (dim * 3, 1, 3, 3), jnp.float32),
        'b_dw': s * jax.random.normal(ks[9], (dim * 3,), jnp.float32),
        'w_proj': s * jax.random.normal(ks[10], (dim, dim, 1, 1), jnp.float32),
        'b_proj': s * jax.random.normal(ks[11], (dim,), jnp.float32),
    }


if __name__ == "__main__":
    dim, num_heads = 8, 2
    B, H, W = 2, 16, 16

    key = jax.random.PRNGKey(0)
    kx, kp = jax.random.split(key)
    x = jax.random.normal(kx, (B, dim, H, W), jnp.float32)
    params = init_params(kp, dim, num_heads)

    out = jax.block_until_ready(attention_forward(x, params, num_heads))
    ref = jax.block_until_ready(reference_forward(x, params, num_heads))

    assert out.shape == (B, dim, H, W)
    max_err = float(jnp.max(jnp.abs(out - ref)))
    assert jnp.allclose(out, ref, rtol=2e-2, atol=2e-2), f"max_err={max_err}"
    print("KERNEL_OK")
</pallas_src>

<mosaic_0001>
module attributes {stable_mosaic.version = 11 : i64} {
  func.func @_pointwise_kernel(%arg0: i32, %arg1: i32, %arg2: memref<1x8x256xf32, #tpu.memory_space<vmem>>, %arg3: memref<24x8xf32, #tpu.memory_space<vmem>>, %arg4: memref<24x1xf32, #tpu.memory_space<vmem>>, %arg5: memref<1x24x256xf32, #tpu.memory_space<vmem>>) attributes {dimension_semantics = [#tpu.dimension_semantics<parallel>, #tpu.dimension_semantics<parallel>], iteration_bounds = array<i64: 2, 1>, scalar_prefetch = 0 : i64, scratch_operands = 0 : i64, tpu.core_type = #tpu.core_type<tc>, window_params = [{transform_indices = @transform_0, window_bounds = array<i64: 1, 8, 256>}, {pipeline_mode = #tpu.pipeline_mode<synchronous>, transform_indices = @transform_1, window_bounds = array<i64: 24, 8>}, {pipeline_mode = #tpu.pipeline_mode<synchronous>, transform_indices = @transform_2, window_bounds = array<i64: 24, 1>}, {transform_indices = @transform_3, window_bounds = array<i64: 1, 24, 256>}]} {
    %c0 = arith.constant 0 : index
    %c0_0 = arith.constant 0 : index
    %c0_1 = arith.constant 0 : index
    %0 = vector.load %arg2[%c0, %c0_0, %c0_1] : memref<1x8x256xf32, #tpu.memory_space<vmem>>, vector<1x8x256xf32>
    %1 = vector.shape_cast %0 : vector<1x8x256xf32> to vector<8x256xf32>
    %2 = arith.truncf %1 : vector<8x256xf32> to vector<8x256xbf16>
    %c0_2 = arith.constant 0 : index
    %c0_3 = arith.constant 0 : index
    %3 = vector.load %arg3[%c0_2, %c0_3] : memref<24x8xf32, #tpu.memory_space<vmem>>, vector<24x8xf32>
    %4 = arith.truncf %3 : vector<24x8xf32> to vector<24x8xbf16>
    %cst = arith.constant dense<0.000000e+00> : vector<24x256xf32>
    %5 = tpu.matmul %4, %2, %cst {dimension_numbers = #tpu.dot_dimension_numbers<[1], [0], [0], [1], [0, 0, 1, 1], [], []>} : vector<24x8xbf16>, vector<8x256xbf16>, vector<24x256xf32> -> vector<24x256xf32>
    %c0_4 = arith.constant 0 : index
    %c0_5 = arith.constant 0 : index
    %6 = vector.load %arg4[%c0_4, %c0_5] : memref<24x1xf32, #tpu.memory_space<vmem>>, vector<24x1xf32>
    %7 = vector.broadcast %6 : vector<24x1xf32> to vector<24x256xf32>
    %8 = arith.addf %5, %7 : vector<24x256xf32>
    %c0_6 = arith.constant 0 : index
    %c0_7 = arith.constant 0 : index
    %c0_8 = arith.constant 0 : index
    %9 = vector.load %arg5[%c0_6, %c0_7, %c0_8] : memref<1x24x256xf32, #tpu.memory_space<vmem>>, vector<1x24x256xf32>
    %10 = vector.shape_cast %9 : vector<1x24x256xf32> to vector<24x256xf32>
    %11 = vector.shape_cast %8 : vector<24x256xf32> to vector<1x24x256xf32>
    tpu.vector_store %arg5[%c0_6, %c0_7, %c0_8], %11 {strides = array<i32>} : memref<1x24x256xf32, #tpu.memory_space<vmem>>, vector<1x24x256xf32>,
    return
  }
  func.func @transform_0(%arg0: i32, %arg1: i32) -> (i32, i32, i32) {
    %c0_i32 = arith.constant 0 : i32
    %c0_i32_0 = arith.constant 0 : i32
    return %arg0, %c0_i32, %arg1 : i32, i32, i32
  }
  func.func @transform_1(%arg0: i32, %arg1: i32) -> (i32, i32) {
    %c0_i32 = arith.constant 0 : i32
    %c0_i32_0 = arith.constant 0 : i32
    %c0_i32_1 = arith.constant 0 : i32
    return %c0_i32, %c0_i32_0 : i32, i32
  }
  func.func @transform_2(%arg0: i32, %arg1: i32) -> (i32, i32) {
    %c0_i32 = arith.constant 0 : i32
    %c0_i32_0 = arith.constant 0 : i32
    %c0_i32_1 = arith.constant 0 : i32
    return %c0_i32, %c0_i32_0 : i32, i32
  }
  func.func @transform_3(%arg0: i32, %arg1: i32) -> (i32, i32, i32) {
    %c0_i32 = arith.constant 0 : i32
    %c0_i32_0 = arith.constant 0 : i32
    return %arg0, %c0_i32, %arg1 : i32, i32, i32
  }
}

</mosaic_0001>

<llo_original>
// kernel: tpu_custom_call.1
$region0: #{tpu_custom_call.1}
  #allocation0 [shape = 'u32[]', space=smem, size = 0x4, offset = 0x4, fixed_abs, tag = 'smem constant byte address 0x4 - core index']
  #allocation1 [shape = 'u32[72,128]{1,0:T(1,128)}', space=vmem, size = 0x9000, scoped, tag = 'internal scratch']
  %s0 = inlined_call_operand.vmem [shape: f32[2,8,256], index: 0, kind: input, shape index: {}]
  %s1 = inlined_call_operand.vmem [shape: f32[24,8], index: 1, kind: input, shape index: {}]
  %s2 = inlined_call_operand.vmem [shape: f32[24,1], index: 2, kind: input, shape index: {}]
  %s3 = inlined_call_operand.hbm [shape: f32[2,24,256], index: 3, kind: output, shape index: {}]
  %s4 = sld [smem:[#allocation0]]
  $region45: #{tpu_custom_call.1} parent=0
    _
  %s6 = ssub.s32 1, %s4
  %s7 = scalar_select 0, %s6, %s4
  $region1: #{tpu_custom_call.1} parent=0
    #allocation2 [shape = 'u8[49152]{0}', space=vmem, size = 0xc000, scoped, tag = 'output window, operand 0']
    #allocation3 [shape = 's32[2]{0}', space=sflag, size = 0x8, scoped, tag = 'scoped memory for tpu_custom_call.1']
    %8 = vsyncpa [#allocation3], 0
    %s9 = scalar_lea.sflag [#allocation3], 1
    %10 = vsyncpa %s9, 0
    loop: start=0, step=1, limit=4
    $region2: #{tpu_custom_call.1} parent=1 // loop_pre_header
      _
    $region3: #{tpu_custom_call.1} parent=1 // loop_header
      %s12 = sphi 0, %s16
      %p13 = scmp.ge.s32.totalorder %s12, 4
      %s19 = sphi 0, %s31
      %s20 = sphi 0, %s27
      %s21 = sphi 0, %s19
      %s22 = sphi 0, %s20
      %s23 = sphi 0, %s21
      %s24 = sphi 0, %s22
      %s36 = sphi 0, %s38
      %s39 = sphi 0, %s36
      %s40 = sphi 0, %s39
      %s56 = sphi 0, %s40
      %s60 = sphi 0, %s60
      %s62 = sphi 0, %s60
      %s63 = sphi 0, %s62
      %s77 = sphi 0, %s63
      %s81 = sphi 0, %s81
      %s83 = sphi 0, %s81
      %s84 = sphi 0, %s83
      %s98 = sphi 0, %s84
      %s106 = sphi 0, %s108
      %s109 = sphi 0, %s106
      %s110 = sphi 0, %s109
      %s126 = sphi 0, %s110
    $region4: #{tpu_custom_call.1} parent=1 // loop_header_branch
      %15 = sbr.rel (%p13) target = $region8
    $region5: #{tpu_custom_call.1} parent=1 // loop_body
      %s17 = ssub.s32 %s12, 1
      %s18 = ssub.s32 %s12, 2
      %s25 = sadd.s32 1, %s20
      %p26 = scmp.ge.s32.totalorder %s25, 1
      %s27 = scalar_select %p26, 0, %s25
      %s28 = sadd.s32 1, %s19
      %s29 = scalar_select %p26, %s28, %s19
      %p30 = scmp.ge.s32.totalorder %s29, 2
      %s31 = scalar_select %p30, 0, %s29
      %s32 = ssub.s32 %s19, %s31
      %s33 = ssub.s32 %s20, %s27
      %s34 = sor.u32 %s32, %s33
      %p35 = scmp.eq.s32.totalorder %s34, 0
      %s37 = sadd.s32 %s36, 1
      %s38 = scalar_select %p35, %s36, %s37
      %p41 = pneg %p35
      %p42 = scmp.eq.s32.totalorder %s12, 1
      %p43 = por %p41, %p42
      %p44 = scmp.ne.s32.totalorder %s36, %s39
      %p45 = scmp.eq.s32.totalorder %s12, 0
      %p46 = por %p44, %p45
      %p47 = scmp.ne.s32.totalorder %s36, %s39
      %p48 = scmp.eq.s32.totalorder %s17, 1
      %p49 = por %p47, %p48
      %p50 = scmp.ne.s32.totalorder %s39, %s40
      %p51 = scmp.eq.s32.totalorder %s17, 0
      %p52 = por %p50, %p51
      %p53 = scmp.ne.s32.totalorder %s39, %s40
      %p54 = scmp.eq.s32.totalorder %s18, 1
      %p55 = por %p53, %p54
      %p57 = scmp.ne.s32.totalorder %s40, %s56
      %p58 = scmp.eq.s32.totalorder %s18, 0
      %p59 = por %p57, %p58
      %s61 = sadd.s32 %s60, 1
      %p64 = scmp.eq.s32.totalorder %s12, 1
      %p65 = scmp.ne.s32.totalorder %s60, %s62
      %p66 = scmp.eq.s32.totalorder %s12, 0
      %p67 = por %p65, %p66
      %p68 = scmp.ne.s32.totalorder %s60, %s62
      %p69 = scmp.eq.s32.totalorder %s17, 1
      %p70 = por %p68, %p69
      %p71 = scmp.ne.s32.totalorder %s62, %s63
      %p72 = scmp.eq.s32.totalorder %s17, 0
      %p73 = por %p71, %p72
      %p74 = scmp.ne.s32.totalorder %s62, %s63
      %p75 = scmp.eq.s32.totalorder %s18, 1
      %p76 = por %p74, %p75
      %p78 = scmp.ne.s32.totalorder %s63, %s77
      %p79 = scmp.eq.s32.totalorder %s18, 0
      %p80 = por %p78, %p79
      %s82 = sadd.s32 %s81, 1
      %p85 = scmp.eq.s32.totalorder %s12, 1
      %p86 = scmp.ne.s32.totalorder %s81, %s83
      %p87 = scmp.eq.s32.totalorder %s12, 0
      %p88 = por %p86, %p87
      %p89 = scmp.ne.s32.totalorder %s81, %s83
      %p90 = scmp.eq.s32.totalorder %s17, 1
      %p91 = por %p89, %p90
      %p92 = scmp.ne.s32.totalorder %s83, %s84
      %p93 = scmp.eq.s32.totalorder %s17, 0
      %p94 = por %p92, %p93
      %p95 = scmp.ne.s32.totalorder %s83, %s84
      %p96 = scmp.eq.s32.totalorder %s18, 1
      %p97 = por %p95, %p96
      %p99 = scmp.ne.s32.totalorder %s84, %s98
      %p100 = scmp.eq.s32.totalorder %s18, 0
      %p101 = por %p99, %p100
      %s102 = ssub.s32 %s19, %s31
      %s103 = ssub.s32 %s20, %s27
      %s104 = sor.u32 %s102, %s103
      %p105 = scmp.eq.s32.totalorder %s104, 0
      %s107 = sadd.s32 %s106, 1
      %s108 = scalar_select %p105, %s106, %s107
      %p111 = pneg %p105
      %p112 = scmp.eq.s32.totalorder %s12, 1
      %p113 = por %p111, %p112
      %p114 = scmp.ne.s32.totalorder %s106, %s109
      %p115 = scmp.eq.s32.totalorder %s12, 0
      %p116 = por %p114, %p115
      %p117 = scmp.ne.s32.totalorder %s106, %s109
      %p118 = scmp.eq.s32.totalorder %s17, 1
      %p119 = por %p117, %p118
      %p120 = scmp.ne.s32.totalorder %s109, %s110
      %p121 = scmp.eq.s32.totalorder %s17, 0
      %p122 = por %p120, %p121
      %p123 = scmp.ne.s32.totalorder %s109, %s110
      %p124 = scmp.eq.s32.totalorder %s18, 1
      %p125 = por %p123, %p124
      %p127 = scmp.ne.s32.totalorder %s110, %s126
      %p128 = scmp.eq.s32.totalorder %s18, 0
      %p129 = por %p127, %p128
      %p130 = scmp.le.s32.totalorder 1, %s12
      %p131 = scmp.lt.s32.totalorder %s12, 3
      %p132 = pnand %p130, %p131
      %p133 = pneg %p132
      // Predicated region
      $region9: #{tpu_custom_call.1} parent=5 // pred_check
        _
      $region10: #{tpu_custom_call.1} parent=5 // pred_check_branch
        %135 = sbr.rel (%p132) target = $region12
      $region11: #{tpu_custom_call.1} parent=5 // pred_region
        %s136 = ssub.s32 %s12, 1
        // Predicated region
        $region13: #{tpu_custom_call.1} parent=11 // pred_check
          %p137 = pneg %p73
        $region14: #{tpu_custom_call.1} parent=11 // pred_check_branch
          %139 = sbr.rel (%p137) target = $region16
        $region15: #{tpu_custom_call.1} parent=11 // pred_region
          _
        $region16: #{tpu_custom_call.1} parent=11 // pred_fallthru
          _
        // Predicated region
        $region17: #{tpu_custom_call.1} parent=11 // pred_check
          %p140 = pneg %p94
        $region18: #{tpu_custom_call.1} parent=11 // pred_check_branch
          %142 = sbr.rel (%p140) target = $region20
        $region19: #{tpu_custom_call.1} parent=11 // pred_region
          _
        $region20: #{tpu_custom_call.1} parent=11 // pred_fallthru
          _
      $region12: #{tpu_custom_call.1} parent=5 // pred_fallthru
        _
      %p143 = scmp.lt.s32.totalorder %s12, 2
      // Predicated region
      $region21: #{tpu_custom_call.1} parent=5 // pred_check
        %p144 = pneg %p143
      $region22: #{tpu_custom_call.1} parent=5 // pred_check_branch
        %146 = sbr.rel (%p144) target = $region24
      $region23: #{tpu_custom_call.1} parent=5 // pred_region
        // Predicated region
        $region25: #{tpu_custom_call.1} parent=23 // pred_check
          %p147 = pneg %p46
        $region26: #{tpu_custom_call.1} parent=23 // pred_check_branch
          %149 = sbr.rel (%p147) target = $region28
        $region27: #{tpu_custom_call.1} parent=23 // pred_region
          %s150 = smul.u32 2, %s20
          %p151 = scmp.lt.s32.totalorder %s19, 1
          %s152 = scalar_select %p151, %s19, 1
          %p153 = scmp.lt.s32.totalorder %s150, 1
          %s154 = scalar_select %p153, %s150, 1
          %s155 = smul.addr %s152, 2
          %s156 = sadd.s32 %s154, %s155
          %s157 = smul.addr %s156, 8
          %s158 = scalar_lea.vmem %s0, %s157
          %s159 = smul.u32 2, %s20
        $region28: #{tpu_custom_call.1} parent=23 // pred_fallthru
          _
      $region24: #{tpu_custom_call.1} parent=5 // pred_fallthru
        _
      %p160 = scmp.le.s32.totalorder 1, %s12
      %p161 = scmp.lt.s32.totalorder %s12, 3
      %p162 = pnand %p160, %p161
      %p163 = pneg %p162
      // Predicated region
      $region29: #{tpu_custom_call.1} parent=5 // pred_check
        _
      $region30: #{tpu_custom_call.1} parent=5 // pred_check_branch
        %165 = sbr.rel (%p162) target = $region32
      $region31: #{tpu_custom_call.1} parent=5 // pred_region
        %s166 = ssub.s32 %s12, 1
        %s167 = smul.u32 2, %s22
        %p168 = scmp.lt.s32.totalorder %s21, 1
        %s169 = scalar_select %p168, %s21, 1
        %p170 = scmp.lt.s32.totalorder %s167, 1
        %s171 = scalar_select %p170, %s167, 1
        %s172 = smul.addr %s169, 2
        %s173 = sadd.s32 %s171, %s172
        %s174 = smul.addr %s173, 8
        %s175 = scalar_lea.vmem %s0, %s174
        %p176 = pneg %p52
        %p177 = pneg %p49
        %p178 = pneg %p73
        %p179 = pneg %p70
        %p180 = pneg %p94
        %p181 = pneg %p91
        %p182 = pneg %p122
        %p183 = pneg %p119
        %s184 = sand.u32 %s109, 1
        %s185 = scalar_lea.sflag [#allocation3], %s184
        %s186 = sand.u32 %s109, 1
        %s187 = smul.addr %s186, 48
        %s188 = scalar_lea.vmem [#allocation2], %s187
        %s189 = smul.u32 2, %s22
        %p190 = scmp.lt.s32.totalorder %s21, 1
        %s191 = scalar_select %p190, %s21, 1
        %p192 = scmp.lt.s32.totalorder %s189, 1
        %s193 = scalar_select %p192, %s189, 1
        %s194 = smul.addr %s191, 2
        %s195 = sadd.s32 %s193, %s194
        %s196 = smul.addr %s195, 8
        %s197 = scalar_lea.vmem %s0, %s196
        %s198 = smul.u32 2, %s22
        %s199 = smul.u32 2, %s22
        %v201 = vld [vmem:[%s197] sm:$0xff]
        %v202 = vld [vmem:[%s197 + $0x8] sm:$0xff]
        %v203 = vpack.c.bf16 %v201, %v201
        %v204 = vpack.c.bf16 %v202, %v202
        %v205 = vld [vmem:[%s1] sm:$0xff]
        %v206 = vld [vmem:[%s1 + $0x8] sm:$0xff]
        %v207 = vld [vmem:[%s1 + $0x10] sm:$0xff]
        %v208 = vpack.c.bf16 %v206, %v205
        %v209 = vpack.c.bf16 %v207, %v207
        %v210 = vld [vmem:[%s2] sm:$0xff]
        %v211 = vld [vmem:[%s2 + $0x8] sm:$0xff]
        %v212 = vld [vmem:[%s2 + $0x10] sm:$0xff]
        %214 = vset.pattern.permute.xlu0 0
        %215 = vperm.xlu0 %214, %v210
        %v216 = vpop.permute.xlu0 %215
        %219 = vset.pattern.permute.xlu0 0
        %220 = vperm.xlu0 %219, %v211
        %v221 = vpop.permute.xlu0 %220
        %224 = vset.pattern.permute.xlu0 0
        %225 = vperm.xlu0 %224, %v212
        %v226 = vpop.permute.xlu0 %225
        %vm228 = vcmask 64512
        %v230 = vsel %vm228, %v208, 0
        %v233 = vsel %vm228, %v209, 0
        %vm235 = vcmask 1043456
        %v237 = vsel %vm235, %v203, 0
        %v240 = vsel %vm235, %v204, 0
        %242 = vmatpush.bf16.msra.mxu0 0
        %243 = vmatpush.bf16.msra.mxu0 0
        %244 = vmatpush.bf16.msra.mxu0 0
        %245 = vmatpush.bf16.msra.mxu0 0
        %246 = vmatpush.bf16.msra.mxu0 0
        %247 = vmatpush.bf16.msra.mxu0 0
        %248 = vmatpush.bf16.msra.mxu0 0
        %249 = vmatpush.bf16.msra.mxu0 %v237
        %250 = vmatmul.bf16.gmra.mxu0 %v230
        %v251 = vpop.f32.mrf.mxu0
        %v252 = vadd.f32 %v216, %v251
        %v253 = vpop.f32.mrf.mxu0
        %v254 = vadd.f32 %v221, %v253
        %255 = vmatmul.bf16.gmra.mxu0 %v233
        %v256 = vpop.f32.mrf.mxu0
        %v257 = vadd.f32 %v226, %v256
        %v258 = vpop.f32.mrf.mxu0
        %259 = vdwg.mxu0
        %260 = vmatpush.bf16.msra.mxu0 0
        %261 = vmatpush.bf16.msra.mxu0 0
        %262 = vmatpush.bf16.msra.mxu0 0
        %263 = vmatpush.bf16.msra.mxu0 0
        %264 = vmatpush.bf16.msra.mxu0 0
        %265 = vmatpush.bf16.msra.mxu0 0
        %266 = vmatpush.bf16.msra.mxu0 0
        %267 = vmatpush.bf16.msra.mxu0 %v240
        %268 = vmatmul.bf16.gmra.mxu0 %v230
        %v269 = vpop.f32.mrf.mxu0
        %v270 = vadd.f32 %v216, %v269
        %v271 = vpop.f32.mrf.mxu0
        %v272 = vadd.f32 %v221, %v271
        %273 = vmatmul.bf16.gmra.mxu0 %v233
        %v274 = vpop.f32.mrf.mxu0
        %v275 = vadd.f32 %v226, %v274
        %v276 = vpop.f32.mrf.mxu0
        %277 = vdwg.mxu0
        %278 = vst [vmem:[%s188] sm:$0xff] %v252
        %279 = vst [vmem:[%s188 + $0x8] sm:$0xff] %v270
        %280 = vst [vmem:[%s188 + $0x10] sm:$0xff] %v254
        %281 = vst [vmem:[%s188 + $0x18] sm:$0xff] %v272
        %282 = vst [vmem:[%s188 + $0x20] sm:$0xff] %v257
        %283 = vst [vmem:[%s188 + $0x28] sm:$0xff] %v275
        %s284 = sand.u32 %s109, 1
        %s285 = scalar_lea.sflag [#allocation3], %s284
        %s286 = sand.u32 %s109, 1
        %s287 = smul.addr %s286, 48
        %s288 = scalar_lea.vmem [#allocation2], %s287
        // Predicated region
        $region33: #{tpu_custom_call.1} parent=31 // pred_check
          %p289 = pneg %p119
        $region34: #{tpu_custom_call.1} parent=31 // pred_check_branch
          %291 = sbr.rel (%p289) target = $region36
        $region35: #{tpu_custom_call.1} parent=31 // pred_region
          %s292 = smul.u32 2, %s22
          %294 = vsyncadd %s285, 0
          %s295 = smul.addr %s21, 6
          %s296 = sadd.s32 %s292, %s295
          %s297 = smul.addr %s296, 8
          %s298 = scalar_lea.hbm %s3, %s297
          %s299 = sshll.u32 %s288, 4
          %s300 = int_to_ptr.vmem [resolvable:$true] %s299
          %s301 = sshll.u32 %s298, 4
          %s302 = int_to_ptr.hbm [resolvable:$true] %s301
          %307 = dma.vmem_to_hbm [thread:$0]  %s300, 768, %s302, %s285, 256, 256, 16
        $region36: #{tpu_custom_call.1} parent=31 // pred_fallthru
          _
      $region32: #{tpu_custom_call.1} parent=5 // pred_fallthru
        _
      %p308 = scmp.le.s32.totalorder 2, %s12
      // Predicated region
      $region37: #{tpu_custom_call.1} parent=5 // pred_check
        %p309 = pneg %p308
      $region38: #{tpu_custom_call.1} parent=5 // pred_check_branch
        %311 = sbr.rel (%p309) target = $region40
      $region39: #{tpu_custom_call.1} parent=5 // pred_region
        %s312 = ssub.s32 %s12, 2
        // Predicated region
        $region41: #{tpu_custom_call.1} parent=39 // pred_check
          %p313 = pneg %p125
        $region42: #{tpu_custom_call.1} parent=39 // pred_check_branch
          %315 = sbr.rel (%p313) target = $region44
        $region43: #{tpu_custom_call.1} parent=39 // pred_region
          %s316 = sand.u32 %s110, 1
          %s317 = scalar_lea.sflag [#allocation3], %s316
          %s318 = sand.u32 %s110, 1
          %s319 = smul.addr %s318, 48
          %s320 = scalar_lea.vmem [#allocation2], %s319
          %322 = dma.done %s317, 768
        $region44: #{tpu_custom_call.1} parent=39 // pred_fallthru
          _
      $region40: #{tpu_custom_call.1} parent=5 // pred_fallthru
        _
    $region6: #{tpu_custom_call.1} parent=1 // loop_footer
      %s16 = sadd.s32 1, %s12
    $region7: #{tpu_custom_call.1} parent=1 // loop_footer_branch
      %11 = sbr.rel target = $region3
    $region8: #{tpu_custom_call.1} parent=1 // loop_exit
      _
    %323 = vsyncpa [#allocation3], 1
    %s324 = scalar_lea.sflag [#allocation3], 1
    %325 = vsyncpa %s324, 1

</llo_original>
